<compile_context>
chip_gen: v7x
topology: tpu7x:2x2x1
jax: 0.10.0
libtpu: 0.0.40
codegen_flags: <defaults>
</compile_context>

<pallas_src>
from functools import partial

import jax
import jax.numpy as jnp
from jax.experimental import pallas as pl
from jax.experimental.pallas import tpu as pltpu

COMPUTE_DTYPE = jnp.bfloat16   # activations / banded weights on the MXU path
BN_EPS = 1e-5


def _round_up(x, m):
    return (x + m - 1) // m * m


def _pick_images_per_step(n):
    """Images per grid step: amortize ~0.35us/step overhead while keeping >=2
    grid programs so the batch axis can shard across both v7x TensorCores."""
    for nb in (4, 2):
        if n % nb == 0 and n // nb >= 2:
            return nb
    return 1


def fold_bn(conv_b, gamma, beta, running_mean, running_var, eps=BN_EPS):
    scale = gamma / jnp.sqrt(running_var + eps)
    bias = (conv_b - running_mean) * scale + beta
    return scale, bias


def _build_banded_weight(w_hwio, scale, W, k_lanes):
    """Banded conv matrix for the lane-dense formulation.

    For a padded activation scratch xpad with lane index p*Ci + ci (p = image
    column; zero rows at top/bottom), the 3x3 "same" conv is
        y[h, w*Co + co] = sum_dy  xpad[h + dy, :] @ band[dy]
    with band[dy][p*Ci+ci, w*Co+co] = w[dy, dx, ci, co] * scale[co] where
    dx = p - w + 1 in {0,1,2}; out-of-image taps are simply absent (= zero pad).
    Returns the dy-stacked matrix of shape (3*k_lanes, W*Co), BN scale folded in.
    """
    _, _, Ci, Co = w_hwio.shape
    ws = (w_hwio * scale[None, None, None, :]).astype(jnp.float32)   # (3,3,Ci,Co)
    p = jnp.arange(W)[:, None]                                       # band row's column
    wcol = jnp.arange(W)[None, :]                                    # output column
    ind = jnp.stack([(p == wcol + dx - 1) for dx in range(3)], axis=0)
    ind = ind.astype(jnp.float32)                                    # (3, W, W)
    band = jnp.einsum("xpw,yxio->ypiwo", ind, ws)                    # (3, W, Ci, W, Co)
    band = band.reshape(3, W * Ci, W * Co)
    band = jnp.pad(band, ((0, 0), (0, k_lanes - W * Ci), (0, 0)))
    return band.reshape(3 * k_lanes, W * Co).astype(COMPUTE_DTYPE)


def _fused_block_kernel(x_ref, wb1_ref, b1_ref, wb2_ref, b2_ref, o_ref,
                        xpad_ref, mid_ref, *, H, W, C_in, C_mid, NB, K1, K2):
    """NB images per grid step; both conv+BN+ReLU layers fused.

    x_ref:    (NB, H, W*C_in)      bf16  lane-dense input slab
    wb1_ref:  (3*K1, W*C_mid)      bf16  banded weights (BN scale folded)
    b1_ref:   (1, W*C_mid)         f32   lane-dense bias row
    wb2_ref:  (3*K2, W*C_out)      bf16
    b2_ref:   (1, W*C_out)         f32
    o_ref:    (NB, H, W*C_out)     bf16  lane-dense output slab
    xpad_ref: (H+2, K1)            bf16  padded input scratch (K1 = rup(W*C_in,128))
    mid_ref:  (H+2, K2)            bf16  padded layer-1 activation scratch
    """
    WC_in, WC_mid = W * C_in, W * C_mid

    # ---- zero the halo: top/bottom padded rows + unused lane-pad columns. ----
    # Done every step (not once at program_id==0): under ("parallel",) semantics
    # the grid is split across TensorCores so core 1 never sees program_id 0.
    # Lane-dense scratch => these are only a handful of vector stores.
    xpad_ref[pl.ds(0, 1), :] = jnp.zeros((1, K1), xpad_ref.dtype)
    xpad_ref[pl.ds(H + 1, 1), :] = jnp.zeros((1, K1), xpad_ref.dtype)
    mid_ref[pl.ds(0, 1), :] = jnp.zeros((1, K2), mid_ref.dtype)
    mid_ref[pl.ds(H + 1, 1), :] = jnp.zeros((1, K2), mid_ref.dtype)
    if WC_in < K1:    # lane-pad columns feed all-zero weight rows; keep them finite
        xpad_ref[pl.ds(1, H), pl.ds(WC_in, K1 - WC_in)] = jnp.zeros(
            (H, K1 - WC_in), xpad_ref.dtype)
    if WC_mid < K2:
        mid_ref[pl.ds(1, H), pl.ds(WC_mid, K2 - WC_mid)] = jnp.zeros(
            (H, K2 - WC_mid), mid_ref.dtype)

    # Hoisted loads (weights/bias are grid-invariant and image-invariant).
    wb1 = wb1_ref[...]
    wb2 = wb2_ref[...]
    b1 = b1_ref[...]
    b2 = b2_ref[...]

    for nb in range(NB):                     # small static unroll; images independent
        # ---- layer 1: conv3x3 + folded BN + ReLU (single MXU matmul) ----
        xpad_ref[pl.ds(1, H), pl.ds(0, WC_in)] = x_ref[nb]
        lhs1 = jnp.concatenate(              # (H, 3*K1); 128-lane aligned pieces
            [xpad_ref[pl.ds(dy, H), :] for dy in range(3)], axis=1)
        y1 = jnp.dot(lhs1, wb1, preferred_element_type=jnp.float32) + b1
        y1 = jnp.maximum(y1, 0.0)            # (H, W*C_mid) f32

        # ---- layer 2: intermediate stays resident in VMEM (fusion) ----
        mid_ref[pl.ds(1, H), pl.ds(0, WC_mid)] = y1.astype(mid_ref.dtype)
        lhs2 = jnp.concatenate(
            [mid_ref[pl.ds(dy, H), :] for dy in range(3)], axis=1)
        y2 = jnp.dot(lhs2, wb2, preferred_element_type=jnp.float32) + b2
        o_ref[nb] = jnp.maximum(y2, 0.0).astype(o_ref.dtype)   # unmasked lane-dense store


@jax.jit
def basic_block_forward(x_nchw, params):
    """BasicBlock forward (eval-mode BN). (N, Cin, H, W) f32 -> (N, Cout, H, W) f32."""
    N, C_in, H, W = x_nchw.shape
    C_mid = params["w1"].shape[-1]
    C_out = params["w2"].shape[-1]
    NB = _pick_images_per_step(N)
    K1 = _round_up(W * C_in, 128)
    K2 = _round_up(W * C_mid, 128)

    # NCHW -> NHWC -> lane-dense (N, H, W*Cin) bf16 at the kernel boundary.
    # TODO(synk): if the surrounding network can carry NHWC/lane-dense
    # activations end-to-end, drop this transpose (a full HBM pass by itself).
    x = jnp.transpose(x_nchw, (0, 2, 3, 1)).reshape(N, H, W * C_in)
    x = x.astype(COMPUTE_DTYPE)

    # Fold eval-mode BatchNorm: scale into the banded weight columns, bias into a
    # lane-dense f32 row, so the kernel epilogue is only add-bias + ReLU.
    s1, b1 = fold_bn(params["b1"], params["gamma1"], params["beta1"],
                     params["mean1"], params["var1"])
    s2, b2 = fold_bn(params["b2"], params["gamma2"], params["beta2"],
                     params["mean2"], params["var2"])
    wb1 = _build_banded_weight(params["w1"], s1, W, K1)    # (3*K1, W*C_mid)
    wb2 = _build_banded_weight(params["w2"], s2, W, K2)    # (3*K2, W*C_out)
    b1_row = jnp.tile(b1, W).reshape(1, W * C_mid).astype(jnp.float32)
    b2_row = jnp.tile(b2, W).reshape(1, W * C_out).astype(jnp.float32)

    kernel = partial(_fused_block_kernel, H=H, W=W, C_in=C_in, C_mid=C_mid,
                     NB=NB, K1=K1, K2=K2)

    out = pl.pallas_call(
        kernel,
        out_shape=jax.ShapeDtypeStruct((N, H, W * C_out), COMPUTE_DTYPE),
        grid_spec=pltpu.PrefetchScalarGridSpec(
            num_scalar_prefetch=0,
            grid=(N // NB,),
            in_specs=[
                pl.BlockSpec((NB, H, W * C_in), lambda n: (n, 0, 0)),
                # Grid-invariant weights/bias: constant index_map -> fetched once.
                # TODO(synk): pipeline_mode=pl.Buffered(1) at real channel widths.
                pl.BlockSpec((3 * K1, W * C_mid), lambda n: (0, 0)),
                pl.BlockSpec((1, W * C_mid), lambda n: (0, 0)),
                pl.BlockSpec((3 * K2, W * C_out), lambda n: (0, 0)),
                pl.BlockSpec((1, W * C_out), lambda n: (0, 0)),
            ],
            out_specs=pl.BlockSpec((NB, H, W * C_out), lambda n: (n, 0, 0)),
            scratch_shapes=[
                pltpu.VMEM((H + 2, K1), COMPUTE_DTYPE),   # padded input image
                pltpu.VMEM((H + 2, K2), COMPUTE_DTYPE),   # padded layer-1 activation
            ],
        ),
        compiler_params=pltpu.CompilerParams(
            dimension_semantics=("parallel",),            # batch-parallel (v7x: 2 TCs)
            vmem_limit_bytes=32 * 1024 * 1024,            # headroom over v5e's 16 MiB default
        ),
    )(x, wb1, b1_row, wb2, b2_row)

    # bf16 kernel output (half the HBM writeback); back to NCHW f32 for the
    # module-facing interface.
    out = out.reshape(N, H, W, C_out).astype(jnp.float32)
    return jnp.transpose(out, (0, 3, 1, 2))


def init_params(key, in_channels, out_channels):
    k1, k2, k3, k4, k5, k6 = jax.random.split(key, 6)
    return {
        # conv weights in HWIO layout: (3, 3, Cin, Cout)
        "w1": jax.random.normal(k1, (3, 3, in_channels, out_channels), jnp.float32) * 0.1,
        "b1": jax.random.normal(k2, (out_channels,), jnp.float32) * 0.1,
        "w2": jax.random.normal(k3, (3, 3, out_channels, out_channels), jnp.float32) * 0.1,
        "b2": jax.random.normal(k4, (out_channels,), jnp.float32) * 0.1,
        # BatchNorm (eval-mode) parameters / running stats
        "gamma1": 1.0 + 0.1 * jax.random.normal(k5, (out_channels,), jnp.float32),
        "beta1": jnp.zeros((out_channels,), jnp.float32) + 0.05,
        "mean1": jnp.zeros((out_channels,), jnp.float32),
        "var1": jnp.ones((out_channels,), jnp.float32),
        "gamma2": 1.0 + 0.1 * jax.random.normal(k6, (out_channels,), jnp.float32),
        "beta2": jnp.zeros((out_channels,), jnp.float32) - 0.05,
        "mean2": jnp.zeros((out_channels,), jnp.float32),
        "var2": jnp.ones((out_channels,), jnp.float32),
    }


def _reference_forward(x_nchw, params, compute_dtype=COMPUTE_DTYPE):
    """Pure-JAX reference (lax.conv) with matching bf16 inputs / f32 accumulation."""
    def conv_bn_relu(x, w, b, gamma, beta, mean, var):
        w_oihw = jnp.transpose(w, (3, 2, 0, 1)).astype(compute_dtype)
        y = jax.lax.conv_general_dilated(
            x.astype(compute_dtype), w_oihw, window_strides=(1, 1),
            padding=((1, 1), (1, 1)),
            dimension_numbers=("NCHW", "OIHW", "NCHW"),
            preferred_element_type=jnp.float32)
        scale = gamma / jnp.sqrt(var + BN_EPS)
        y = (y + b[None, :, None, None] - mean[None, :, None, None]) \
            * scale[None, :, None, None] + beta[None, :, None, None]
        return jnp.maximum(y, 0.0)

    x = conv_bn_relu(x_nchw, params["w1"], params["b1"], params["gamma1"],
                     params["beta1"], params["mean1"], params["var1"])
    x = conv_bn_relu(x, params["w2"], params["b2"], params["gamma2"],
                     params["beta2"], params["mean2"], params["var2"])
    return x


if __name__ == "__main__":
    key = jax.random.PRNGKey(0)
    k_x, k_p = jax.random.split(key)

    N, Cin, Cout, H, W = 2, 4, 8, 16, 16
    x = jax.random.normal(k_x, (N, Cin, H, W), jnp.float32)
    params = init_params(k_p, Cin, Cout)

    out = jax.block_until_ready(basic_block_forward(x, params))
    ref = jax.block_until_ready(_reference_forward(x, params))

    assert out.shape == (N, Cout, H, W), out.shape
    max_err = float(jnp.max(jnp.abs(out - ref)))
    # bf16 kernel output + BN-scale folded into bf16 weights -> loosened tolerance.
    assert jnp.allclose(out, ref, rtol=5e-2, atol=5e-2), max_err

    print("KERNEL_OK")
</pallas_src>

<mosaic_0001>
module attributes {stable_mosaic.version = 11 : i64} {
  func.func @_fused_block_kernel(%arg0: i32, %arg1: memref<1x16x64xbf16, #tpu.memory_space<vmem>>, %arg2: memref<384x128xbf16, #tpu.memory_space<vmem>>, %arg3: memref<1x128xf32, #tpu.memory_space<vmem>>, %arg4: memref<384x128xbf16, #tpu.memory_space<vmem>>, %arg5: memref<1x128xf32, #tpu.memory_space<vmem>>, %arg6: memref<1x16x128xbf16, #tpu.memory_space<vmem>>, %arg7: memref<18x128xbf16, #tpu.memory_space<vmem>>, %arg8: memref<18x128xbf16, #tpu.memory_space<vmem>>) attributes {dimension_semantics = [#tpu.dimension_semantics<parallel>], iteration_bounds = array<i64: 2>, scalar_prefetch = 0 : i64, scratch_operands = 2 : i64, tpu.core_type = #tpu.core_type<tc>, window_params = [{transform_indices = @transform_0, window_bounds = array<i64: 1, 16, 64>}, {pipeline_mode = #tpu.pipeline_mode<synchronous>, transform_indices = @transform_1, window_bounds = array<i64: 384, 128>}, {pipeline_mode = #tpu.pipeline_mode<synchronous>, transform_indices = @transform_2, window_bounds = array<i64: 1, 128>}, {pipeline_mode = #tpu.pipeline_mode<synchronous>, transform_indices = @transform_3, window_bounds = array<i64: 384, 128>}, {pipeline_mode = #tpu.pipeline_mode<synchronous>, transform_indices = @transform_4, window_bounds = array<i64: 1, 128>}, {transform_indices = @transform_5, window_bounds = array<i64: 1, 16, 128>}]} {
    %cst = arith.constant 0.000000e+00 : bf16
    %0 = vector.broadcast %cst : bf16 to vector<1x128xbf16>
    %c0 = arith.constant 0 : index
    %c0_0 = arith.constant 0 : index
    %1 = vector.load %arg7[%c0, %c0_0] : memref<18x128xbf16, #tpu.memory_space<vmem>>, vector<1x128xbf16>
    tpu.vector_store %arg7[%c0, %c0_0], %0 {strides = array<i32>} : memref<18x128xbf16, #tpu.memory_space<vmem>>, vector<1x128xbf16>,
    %cst_1 = arith.constant 0.000000e+00 : bf16
    %2 = vector.broadcast %cst_1 : bf16 to vector<1x128xbf16>
    %c17 = arith.constant 17 : index
    %c0_2 = arith.constant 0 : index
    %3 = vector.load %arg7[%c17, %c0_2] : memref<18x128xbf16, #tpu.memory_space<vmem>>, vector<1x128xbf16>
    tpu.vector_store %arg7[%c17, %c0_2], %2 {strides = array<i32>} : memref<18x128xbf16, #tpu.memory_space<vmem>>, vector<1x128xbf16>,
    %cst_3 = arith.constant 0.000000e+00 : bf16
    %4 = vector.broadcast %cst_3 : bf16 to vector<1x128xbf16>
    %c0_4 = arith.constant 0 : index
    %c0_5 = arith.constant 0 : index
    %5 = vector.load %arg8[%c0_4, %c0_5] : memref<18x128xbf16, #tpu.memory_space<vmem>>, vector<1x128xbf16>
    tpu.vector_store %arg8[%c0_4, %c0_5], %4 {strides = array<i32>} : memref<18x128xbf16, #tpu.memory_space<vmem>>, vector<1x128xbf16>,
    %cst_6 = arith.constant 0.000000e+00 : bf16
    %6 = vector.broadcast %cst_6 : bf16 to vector<1x128xbf16>
    %c17_7 = arith.constant 17 : index
    %c0_8 = arith.constant 0 : index
    %7 = vector.load %arg8[%c17_7, %c0_8] : memref<18x128xbf16, #tpu.memory_space<vmem>>, vector<1x128xbf16>
    tpu.vector_store %arg8[%c17_7, %c0_8], %6 {strides = array<i32>} : memref<18x128xbf16, #tpu.memory_space<vmem>>, vector<1x128xbf16>,
    %cst_9 = arith.constant 0.000000e+00 : bf16
    %8 = vector.broadcast %cst_9 : bf16 to vector<16x64xbf16>
    %c1 = arith.constant 1 : index
    %c64 = arith.constant 64 : index
    %9 = vector.load %arg7[%c1, %c64] : memref<18x128xbf16, #tpu.memory_space<vmem>>, vector<16x64xbf16>
    tpu.vector_store %arg7[%c1, %c64], %8 {strides = array<i32>} : memref<18x128xbf16, #tpu.memory_space<vmem>>, vector<16x64xbf16>,
    %c0_10 = arith.constant 0 : index
    %c0_11 = arith.constant 0 : index
    %10 = vector.load %arg2[%c0_10, %c0_11] : memref<384x128xbf16, #tpu.memory_space<vmem>>, vector<384x128xbf16>
    %c0_12 = arith.constant 0 : index
    %c0_13 = arith.constant 0 : index
    %11 = vector.load %arg4[%c0_12, %c0_13] : memref<384x128xbf16, #tpu.memory_space<vmem>>, vector<384x128xbf16>
    %c0_14 = arith.constant 0 : index
    %c0_15 = arith.constant 0 : index
    %12 = vector.load %arg3[%c0_14, %c0_15] : memref<1x128xf32, #tpu.memory_space<vmem>>, vector<1x128xf32>
    %c0_16 = arith.constant 0 : index
    %c0_17 = arith.constant 0 : index
    %13 = vector.load %arg5[%c0_16, %c0_17] : memref<1x128xf32, #tpu.memory_space<vmem>>, vector<1x128xf32>
    %c0_18 = arith.constant 0 : index
    %c0_19 = arith.constant 0 : index
    %c0_20 = arith.constant 0 : index
    %14 = vector.load %arg1[%c0_18, %c0_19, %c0_20] : memref<1x16x64xbf16, #tpu.memory_space<vmem>>, vector<1x16x64xbf16>
    %15 = vector.shape_cast %14 : vector<1x16x64xbf16> to vector<16x64xbf16>
    %c1_21 = arith.constant 1 : index
    %c0_22 = arith.constant 0 : index
    %16 = vector.load %arg7[%c1_21, %c0_22] : memref<18x128xbf16, #tpu.memory_space<vmem>>, vector<16x64xbf16>
    tpu.vector_store %arg7[%c1_21, %c0_22], %15 {strides = array<i32>} : memref<18x128xbf16, #tpu.memory_space<vmem>>, vector<16x64xbf16>,
    %c0_23 = arith.constant 0 : index
    %c0_24 = arith.constant 0 : index
    %17 = vector.load %arg7[%c0_23, %c0_24] : memref<18x128xbf16, #tpu.memory_space<vmem>>, vector<16x128xbf16>
    %c1_25 = arith.constant 1 : index
    %c0_26 = arith.constant 0 : index
    %18 = vector.load %arg7[%c1_25, %c0_26] : memref<18x128xbf16, #tpu.memory_space<vmem>>, vector<16x128xbf16>
    %c2 = arith.constant 2 : index
    %c0_27 = arith.constant 0 : index
    %19 = vector.load %arg7[%c2, %c0_27] : memref<18x128xbf16, #tpu.memory_space<vmem>>, vector<16x128xbf16>
    %20 = tpu.concatenate %17, %18, %19 in 1 : vector<16x128xbf16>, vector<16x128xbf16>, vector<16x128xbf16> -> vector<16x384xbf16>
    %cst_28 = arith.constant dense<0.000000e+00> : vector<16x128xf32>
    %21 = tpu.matmul %20, %10, %cst_28 {dimension_numbers = #tpu.dot_dimension_numbers<[1], [0], [0], [1], [0, 0, 1, 1], [], []>} : vector<16x384xbf16>, vector<384x128xbf16>, vector<16x128xf32> -> vector<16x128xf32>
    %22 = vector.broadcast %12 : vector<1x128xf32> to vector<16x128xf32>
    %23 = arith.addf %21, %22 : vector<16x128xf32>
    %cst_29 = arith.constant 0.000000e+00 : f32
    %24 = vector.broadcast %cst_29 : f32 to vector<16x128xf32>
    %25 = arith.maximumf %23, %24 : vector<16x128xf32>
    %26 = arith.truncf %25 : vector<16x128xf32> to vector<16x128xbf16>
    %c1_30 = arith.constant 1 : index
    %c0_31 = arith.constant 0 : index
    %27 = vector.load %arg8[%c1_30, %c0_31] : memref<18x128xbf16, #tpu.memory_space<vmem>>, vector<16x128xbf16>
    tpu.vector_store %arg8[%c1_30, %c0_31], %26 {strides = array<i32>} : memref<18x128xbf16, #tpu.memory_space<vmem>>, vector<16x128xbf16>,
    %c0_32 = arith.constant 0 : index
    %c0_33 = arith.constant 0 : index
    %28 = vector.load %arg8[%c0_32, %c0_33] : memref<18x128xbf16, #tpu.memory_space<vmem>>, vector<16x128xbf16>
    %c1_34 = arith.constant 1 : index
    %c0_35 = arith.constant 0 : index
    %29 = vector.load %arg8[%c1_34, %c0_35] : memref<18x128xbf16, #tpu.memory_space<vmem>>, vector<16x128xbf16>
    %c2_36 = arith.constant 2 : index
    %c0_37 = arith.constant 0 : index
    %30 = vector.load %arg8[%c2_36, %c0_37] : memref<18x128xbf16, #tpu.memory_space<vmem>>, vector<16x128xbf16>
    %31 = tpu.concatenate %28, %29, %30 in 1 : vector<16x128xbf16>, vector<16x128xbf16>, vector<16x128xbf16> -> vector<16x384xbf16>
    %cst_38 = arith.constant dense<0.000000e+00> : vector<16x128xf32>
    %32 = tpu.matmul %31, %11, %cst_38 {dimension_numbers = #tpu.dot_dimension_numbers<[1], [0], [0], [1], [0, 0, 1, 1], [], []>} : vector<16x384xbf16>, vector<384x128xbf16>, vector<16x128xf32> -> vector<16x128xf32>
    %33 = vector.broadcast %13 : vector<1x128xf32> to vector<16x128xf32>
    %34 = arith.addf %32, %33 : vector<16x128xf32>
    %cst_39 = arith.constant 0.000000e+00 : f32
    %35 = vector.broadcast %cst_39 : f32 to vector<16x128xf32>
    %36 = arith.maximumf %34, %35 : vector<16x128xf32>
    %37 = arith.truncf %36 : vector<16x128xf32> to vector<16x128xbf16>
    %c0_40 = arith.constant 0 : index
    %c0_41 = arith.constant 0 : index
    %c0_42 = arith.constant 0 : index
    %38 = vector.load %arg6[%c0_40, %c0_41, %c0_42] : memref<1x16x128xbf16, #tpu.memory_space<vmem>>, vector<1x16x128xbf16>
    %39 = vector.shape_cast %38 : vector<1x16x128xbf16> to vector<16x128xbf16>
    %40 = vector.shape_cast %37 : vector<16x128xbf16> to vector<1x16x128xbf16>
    tpu.vector_store %arg6[%c0_40, %c0_41, %c0_42], %40 {strides = array<i32>} : memref<1x16x128xbf16, #tpu.memory_space<vmem>>, vector<1x16x128xbf16>,
    return
  }
  func.func @transform_0(%arg0: i32) -> (i32, i32, i32) {
    %c0_i32 = arith.constant 0 : i32
    %c0_i32_0 = arith.constant 0 : i32
    %c0_i32_1 = arith.constant 0 : i32
    return %arg0, %c0_i32, %c0_i32_0 : i32, i32, i32
  }
  func.func @transform_1(%arg0: i32) -> (i32, i32) {
    %c0_i32 = arith.constant 0 : i32
    %c0_i32_0 = arith.constant 0 : i32
    %c0_i32_1 = arith.constant 0 : i32
    return %c0_i32, %c0_i32_0 : i32, i32
  }
  func.func @transform_2(%arg0: i32) -> (i32, i32) {
    %c0_i32 = arith.constant 0 : i32
    %c0_i32_0 = arith.constant 0 : i32
    %c0_i32_1 = arith.constant 0 : i32
    return %c0_i32, %c0_i32_0 : i32, i32
  }
  func.func @transform_3(%arg0: i32) -> (i32, i32) {
    %c0_i32 = arith.constant 0 : i32
    %c0_i32_0 = arith.constant 0 : i32
    %c0_i32_1 = arith.constant 0 : i32
    return %c0_i32, %c0_i32_0 : i32, i32
  }
  func.func @transform_4(%arg0: i32) -> (i32, i32) {
    %c0_i32 = arith.constant 0 : i32
    %c0_i32_0 = arith.constant 0 : i32
    %c0_i32_1 = arith.constant 0 : i32
    return %c0_i32, %c0_i32_0 : i32, i32
  }
  func.func @transform_5(%arg0: i32) -> (i32, i32, i32) {
    %c0_i32 = arith.constant 0 : i32
    %c0_i32_0 = arith.constant 0 : i32
    %c0_i32_1 = arith.constant 0 : i32
    return %arg0, %c0_i32, %c0_i32_0 : i32, i32, i32
  }
}

</mosaic_0001>

<llo_original>
// kernel: tile.13
$region0: #{tile.13}
  #allocation0 [shape = 's32[1]{0}', space=sflag, size = 0x4, scoped, tag = 'scoped memory for tile.13']
  %s0 = inlined_call_operand.vmem [shape: f32[8], index: 0, kind: input, shape index: {}]
  %s1 = inlined_call_operand.vmem [shape: f32[16,8], index: 1, kind: output, shape index: {}]
  // Predicated region
  $region2: #{tile.13} parent=0 // pred_check
    _
  $region3: #{tile.13} parent=0 // pred_check_branch
    %3 = sbr.rel (0) target = $region5
  $region4: #{tile.13} parent=0 // pred_region
    _
  $region5: #{tile.13} parent=0 // pred_fallthru
    _
  %v4 = vld [vmem:[%s0] ss:$0 sm:$0xff]
  %5 = vst [vmem:[%s1] sm:$0xff] %v4
  %s6 = scalar_lea.vmem %s1, 8
  %7 = vst [vmem:[%s6] sm:$0xff] %v4

// kernel: tile.14
$region0: #{tile.14}
  %s0 = inlined_call_operand.vmem [shape: f32[16,8], index: 0, kind: input, shape index: {}]
  %s1 = inlined_call_operand.vmem [shape: f32[1,128], index: 1, kind: output, shape index: {}]
  $region1: #{tile.14} parent=0
    #allocation0 [shape = 'u8[4096]{0}', space=vmem, size = 0x1000, scoped, tag = 'scoped mem for output reshape']
    %v2 = vld [vmem:[%s0] sm:$0x1]
    %vm3 = vcmask 64512
    %4 = vst.msk [vmem:[#allocation0] sm:$0x1] %vm3, %v2
    %s5 = scalar_lea.vmem %s0, 15
    %v6 = vld [vmem:[%s5] sm:$0x1]
    %7 = vrot.lane.b32.xlu0 %v6, 120
    %v8 = vpop.permute.xlu0 %7
    %vm9 = vcmask 1048512
    %10 = vst.msk [vmem:[#allocation0] sm:$0x1] %vm9, %v8
    %s11 = scalar_lea.vmem %s0, 14
    %v12 = vld [vmem:[%s11] sm:$0x1]
    %13 = vrot.lane.b32.xlu0 %v12, 112
    %v14 = vpop.permute.xlu0 %13
    %vm15 = vcmask 982912
    %16 = vst.msk [vmem:[#allocation0] sm:$0x1] %vm15, %v14
    %s17 = scalar_lea.vmem %s0, 13
    %v18 = vld [vmem:[%s17] sm:$0x1]
    %19 = vrot.lane.b32.xlu0 %v18, 104
    %v20 = vpop.permute.xlu0 %19
    %vm21 = vcmask 917312
    %22 = vst.msk [vmem:[#allocation0] sm:$0x1] %vm21, %v20
    %s23 = scalar_lea.vmem %s0, 12
    %v24 = vld [vmem:[%s23] sm:$0x1]
    %25 = vrot.lane.b32.xlu0 %v24, 96
    %v26 = vpop.permute.xlu0 %25
    %vm27 = vcmask 851712
    %28 = vst.msk [vmem:[#allocation0] sm:$0x1] %vm27, %v26
    %s29 = scalar_lea.vmem %s0, 11
    %v30 = vld [vmem:[%s29] sm:$0x1]
    %31 = vrot.lane.b32.xlu0 %v30, 88
    %v32 = vpop.permute.xlu0 %31
    %vm33 = vcmask 786112
    %34 = vst.msk [vmem:[#allocation0] sm:$0x1] %vm33, %v32
    %s35 = scalar_lea.vmem %s0, 10
    %v36 = vld [vmem:[%s35] sm:$0x1]
    %37 = vrot.lane.b32.xlu0 %v36, 80
    %v38 = vpop.permute.xlu0 %37
    %vm39 = vcmask 720512
    %40 = vst.msk [vmem:[#allocation0] sm:$0x1] %vm39, %v38
    %s41 = scalar_lea.vmem %s0, 9
    %v42 = vld [vmem:[%s41] sm:$0x1]
    %43 = vrot.lane.b32.xlu0 %v42, 72
    %v44 = vpop.permute.xlu0 %43
    %vm45 = vcmask 654912
    %46 = vst.msk [vmem:[#allocation0] sm:$0x1] %vm45, %v44
    %s47 = scalar_lea.vmem %s0, 8
    %v48 = vld [vmem:[%s47] sm:$0x1]
    %49 = vrot.lane.b32.xlu0 %v48, 64
    %v50 = vpop.permute.xlu0 %49
    %vm51 = vcmask 589312
    %52 = vst.msk [vmem:[#allocation0] sm:$0x1] %vm51, %v50
    %s53 = scalar_lea.vmem %s0, 7
    %v54 = vld [vmem:[%s53] sm:$0x1]
    %55 = vrot.lane.b32.xlu0 %v54, 56
    %v56 = vpop.permute.xlu0 %55
    %vm57 = vcmask 523712
    %58 = vst.msk [vmem:[#allocation0] sm:$0x1] %vm57, %v56
    %s59 = scalar_lea.vmem %s0, 6
    %v60 = vld [vmem:[%s59] sm:$0x1]
    %61 = vrot.lane.b32.xlu0 %v60, 48
    %v62 = vpop.permute.xlu0 %61
    %vm63 = vcmask 458112
    %64 = vst.msk [vmem:[#allocation0] sm:$0x1] %vm63, %v62
    %s65 = scalar_lea.vmem %s0, 5
    %v66 = vld [vmem:[%s65] sm:$0x1]
    %67 = vrot.lane.b32.xlu0 %v66, 40
    %v68 = vpop.permute.xlu0 %67
    %vm69 = vcmask 392512
    %70 = vst.msk [vmem:[#allocation0] sm:$0x1] %vm69, %v68
    %s71 = scalar_lea.vmem %s0, 4
    %v72 = vld [vmem:[%s71] sm:$0x1]
    %73 = vrot.lane.b32.xlu0 %v72, 32
    %v74 = vpop.permute.xlu0 %73
    %vm75 = vcmask 326912
    %76 = vst.msk [vmem:[#allocation0] sm:$0x1] %vm75, %v74
    %s77 = scalar_lea.vmem %s0, 3
    %v78 = vld [vmem:[%s77] sm:$0x1]
    %79 = vrot.lane.b32.xlu0 %v78, 24
    %v80 = vpop.permute.xlu0 %79
    %vm81 = vcmask 261312
    %82 = vst.msk [vmem:[#allocation0] sm:$0x1] %vm81, %v80
    %s83 = scalar_lea.vmem %s0, 2
    %v84 = vld [vmem:[%s83] sm:$0x1]
    %85 = vrot.lane.b32.xlu0 %v84, 16
    %v86 = vpop.permute.xlu0 %85
    %vm87 = vcmask 195712
    %88 = vst.msk [vmem:[#allocation0] sm:$0x1] %vm87, %v86
    %s89 = scalar_lea.vmem %s0, 1
    %v90 = vld [vmem:[%s89] sm:$0x1]
    %91 = vrot.lane.b32.xlu0 %v90, 8
    %v92 = vpop.permute.xlu0 %91
    %vm93 = vcmask 130112
    %94 = vst.msk [vmem:[#allocation0] sm:$0x1] %vm93, %v92
    %s96 = sshllo.u32 0, 1
    %v98 = vld [vmem:[#allocation0] sm:%s96]
    %s99 = sshllo.u32 0, 1
    %100 = vst [vmem:[%s1] sm:%s99] %v98

// kernel: basic_block_forward.1
$region0: #{basic_block_forward.1}
  #allocation0 [shape = 'u32[]', space=smem, size = 0x4, offset = 0x4, fixed_abs, tag = 'smem constant byte address 0x4 - core index']
  #allocation1 [shape = 'u32[144,128]{1,0:T(1,128)}', space=vmem, size = 0x12000, scoped, tag = 'internal scratch']
  #allocation2 [shape = 'bf16[18,128]{1,0:T(8,128)(2,1)}', space=vmem, size = 0x1800, scoped, tag = 'scratch operand']
  #allocation3 [shape = 'bf16[18,128]{1,0:T(8,128)(2,1)}', space=vmem, size = 0x1800, scoped, tag = 'scratch operand']
  %s0 = inlined_call_operand.vmem [shape: bf16[2,16,64], index: 0, kind: input, shape index: {}]
  %s1 = inlined_call_operand.vmem [shape: bf16[384,128], index: 1, kind: input, shape index: {}]
  %s2 = inlined_call_operand.vmem [shape: f32[1,128], index: 2, kind: input, shape index: {}]
  %s3 = inlined_call_operand.vmem [shape: bf16[384,128], index: 3, kind: input, shape index: {}]
  %s4 = inlined_call_operand.vmem [shape: f32[1,128], index: 4, kind: input, shape index: {}]
  %s5 = inlined_call_operand.vmem [shape: bf16[2,16,128], index: 5, kind: output, shape index: {}]
  %s6 = sld [smem:[#allocation0]]
  $region53: #{basic_block_forward.1} parent=0
    _
  %s8 = ssub.s32 1, %s6
  %s9 = scalar_select 0, %s8, %s6
  loop: start=0, step=1, limit=4
  $region2: #{basic_block_forward.1} parent=0 // loop_pre_header
    _
  $region3: #{basic_block_forward.1} parent=0 // loop_header
    %s11 = sphi 0, %s15
    %p12 = scmp.ge.s32.totalorder %s11, 4
    %s21 = sphi 0, %s23
    %s24 = sphi 0, %s21
    %s25 = sphi 0, %s24
    %s41 = sphi 0, %s25
    %s45 = sphi 0, %s45
    %s47 = sphi 0, %s45
    %s48 = sphi 0, %s47
    %s62 = sphi 0, %s48
    %s66 = sphi 0, %s66
    %s68 = sphi 0, %s66
    %s69 = sphi 0, %s68
    %s83 = sphi 0, %s69
    %s87 = sphi 0, %s87
    %s89 = sphi 0, %s87
    %s90 = sphi 0, %s89
    %s104 = sphi 0, %s90
    %s108 = sphi 0, %s108
    %s110 = sphi 0, %s108
    %s111 = sphi 0, %s110
    %s125 = sphi 0, %s111
    %s131 = sphi 0, %s133
    %s134 = sphi 0, %s131
    %s135 = sphi 0, %s134
    %s151 = sphi 0, %s135
  $region4: #{basic_block_forward.1} parent=0 // loop_header_branch
    %14 = sbr.rel (%p12) target = $region8
  $region5: #{basic_block_forward.1} parent=0 // loop_body
    %s16 = ssub.s32 %s11, 1
    %s17 = ssub.s32 %s11, 2
    %s18 = sadd.s32 %s11, 1
    %s19 = ssub.s32 %s11, %s18
    %p20 = scmp.eq.s32.totalorder %s19, 0
    %s22 = sadd.s32 %s21, 1
    %s23 = scalar_select %p20, %s21, %s22
    %p26 = pneg %p20
    %p27 = scmp.eq.s32.totalorder %s11, 1
    %p28 = por %p26, %p27
    %p29 = scmp.ne.s32.totalorder %s21, %s24
    %p30 = scmp.eq.s32.totalorder %s11, 0
    %p31 = por %p29, %p30
    %p32 = scmp.ne.s32.totalorder %s21, %s24
    %p33 = scmp.eq.s32.totalorder %s16, 1
    %p34 = por %p32, %p33
    %p35 = scmp.ne.s32.totalorder %s24, %s25
    %p36 = scmp.eq.s32.totalorder %s16, 0
    %p37 = por %p35, %p36
    %p38 = scmp.ne.s32.totalorder %s24, %s25
    %p39 = scmp.eq.s32.totalorder %s17, 1
    %p40 = por %p38, %p39
    %p42 = scmp.ne.s32.totalorder %s25, %s41
    %p43 = scmp.eq.s32.totalorder %s17, 0
    %p44 = por %p42, %p43
    %s46 = sadd.s32 %s45, 1
    %p49 = scmp.eq.s32.totalorder %s11, 1
    %p50 = scmp.ne.s32.totalorder %s45, %s47
    %p51 = scmp.eq.s32.totalorder %s11, 0
    %p52 = por %p50, %p51
    %p53 = scmp.ne.s32.totalorder %s45, %s47
    %p54 = scmp.eq.s32.totalorder %s16, 1
    %p55 = por %p53, %p54
    %p56 = scmp.ne.s32.totalorder %s47, %s48
    %p57 = scmp.eq.s32.totalorder %s16, 0
    %p58 = por %p56, %p57
    %p59 = scmp.ne.s32.totalorder %s47, %s48
    %p60 = scmp.eq.s32.totalorder %s17, 1
    %p61 = por %p59, %p60
    %p63 = scmp.ne.s32.totalorder %s48, %s62
    %p64 = scmp.eq.s32.totalorder %s17, 0
    %p65 = por %p63, %p64
    %s67 = sadd.s32 %s66, 1
    %p70 = scmp.eq.s32.totalorder %s11, 1
    %p71 = scmp.ne.s32.totalorder %s66, %s68
    %p72 = scmp.eq.s32.totalorder %s11, 0
    %p73 = por %p71, %p72
    %p74 = scmp.ne.s32.totalorder %s66, %s68
    %p75 = scmp.eq.s32.totalorder %s16, 1
    %p76 = por %p74, %p75
    %p77 = scmp.ne.s32.totalorder %s68, %s69
    %p78 = scmp.eq.s32.totalorder %s16, 0
    %p79 = por %p77, %p78
    %p80 = scmp.ne.s32.totalorder %s68, %s69
    %p81 = scmp.eq.s32.totalorder %s17, 1
    %p82 = por %p80, %p81
    %p84 = scmp.ne.s32.totalorder %s69, %s83
    %p85 = scmp.eq.s32.totalorder %s17, 0
    %p86 = por %p84, %p85
    %s88 = sadd.s32 %s87, 1
    %p91 = scmp.eq.s32.totalorder %s11, 1
    %p92 = scmp.ne.s32.totalorder %s87, %s89
    %p93 = scmp.eq.s32.totalorder %s11, 0
    %p94 = por %p92, %p93
    %p95 = scmp.ne.s32.totalorder %s87, %s89
    %p96 = scmp.eq.s32.totalorder %s16, 1
    %p97 = por %p95, %p96
    %p98 = scmp.ne.s32.totalorder %s89, %s90
    %p99 = scmp.eq.s32.totalorder %s16, 0
    %p100 = por %p98, %p99
    %p101 = scmp.ne.s32.totalorder %s89, %s90
    %p102 = scmp.eq.s32.totalorder %s17, 1
    %p103 = por %p101, %p102
    %p105 = scmp.ne.s32.totalorder %s90, %s104
    %p106 = scmp.eq.s32.totalorder %s17, 0
    %p107 = por %p105, %p106
    %s109 = sadd.s32 %s108, 1
    %p112 = scmp.eq.s32.totalorder %s11, 1
    %p113 = scmp.ne.s32.totalorder %s108, %s110
    %p114 = scmp.eq.s32.totalorder %s11, 0
    %p115 = por %p113, %p114
    %p116 = scmp.ne.s32.totalorder %s108, %s110
    %p117 = scmp.eq.s32.totalorder %s16, 1
    %p118 = por %p116, %p117
    %p119 = scmp.ne.s32.totalorder %s110, %s111
    %p120 = scmp.eq.s32.totalorder %s16, 0
    %p121 = por %p119, %p120
    %p122 = scmp.ne.s32.totalorder %s110, %s111
    %p123 = scmp.eq.s32.totalorder %s17, 1
    %p124 = por %p122, %p123
    %p126 = scmp.ne.s32.totalorder %s111, %s125
    %p127 = scmp.eq.s32.totalorder %s17, 0
    %p128 = por %p126, %p127
    %s129 = ssub.s32 %s11, %s18
    %p130 = scmp.eq.s32.totalorder %s129, 0
    %s132 = sadd.s32 %s131, 1
    %s133 = scalar_select %p130, %s131, %s132
    %p136 = pneg %p130
    %p137 = scmp.eq.s32.totalorder %s11, 1
    %p138 = por %p136, %p137
    %p139 = scmp.ne.s32.totalorder %s131, %s134
    %p140 = scmp.eq.s32.totalorder %s11, 0
    %p141 = por %p139, %p140
    %p142 = scmp.ne.s32.totalorder %s131, %s134
    %p143 = scmp.eq.s32.totalorder %s16, 1
    %p144 = por %p142, %p143
    %p145 = scmp.ne.s32.totalorder %s134, %s135
    %p146 = scmp.eq.s32.totalorder %s16, 0
    %p147 = por %p145, %p146
    %p148 = scmp.ne.s32.totalorder %s134, %s135
    %p149 = scmp.eq.s32.totalorder %s17, 1
    %p150 = por %p148, %p149
    %p152 = scmp.ne.s32.totalorder %s135, %s151
    %p153 = scmp.eq.s32.totalorder %s17, 0
    %p154 = por %p152, %p153
    %p155 = scmp.le.s32.totalorder 1, %s11
    %p156 = scmp.lt.s32.totalorder %s11, 3
    %p157 = pnand %p155, %p156
    %p158 = pneg %p157
    // Predicated region
    $region9: #{basic_block_forward.1} parent=5 // pred_check
      _
    $region10: #{basic_block_forward.1} parent=5 // pred_check_branch
      %160 = sbr.rel (%p157) target = $region12
    $region11: #{basic_block_forward.1} parent=5 // pred_region
      %s161 = ssub.s32 %s11, 1
      // Predicated region
      $region13: #{basic_block_forward.1} parent=11 // pred_check
        %p162 = pneg %p58
      $region14: #{basic_block_forward.1} parent=11 // pred_check_branch
        %164 = sbr.rel (%p162) target = $region16
      $region15: #{basic_block_forward.1} parent=11 // pred_region
        _
      $region16: #{basic_block_forward.1} parent=11 // pred_fallthru
        _
      // Predicated region
      $region17: #{basic_block_forward.1} parent=11 // pred_check
        %p165 = pneg %p79
      $region18: #{basic_block_forward.1} parent=11 // pred_check_branch
        %167 = sbr.rel (%p165) target = $region20
      $region19: #{basic_block_forward.1} parent=11 // pred_region
        _
      $region20: #{basic_block_forward.1} parent=11 // pred_fallthru
        _
      // Predicated region
      $region21: #{basic_block_forward.1} parent=11 // pred_check
        %p168 = pneg %p100
      $region22: #{basic_block_forward.1} parent=11 // pred_check_branch
        %170 = sbr.rel (%p168) target = $region24
      $region23: #{basic_block_forward.1} parent=11 // pred_region
        _
      $region24: #{basic_block_forward.1} parent=11 // pred_fallthru
        _
      // Predicated region
      $region25: #{basic_block_forward.1} parent=11 // pred_check
        %p171 = pneg %p121
      $region26: #{basic_block_forward.1} parent=11 // pred_check_branch
        %173 = sbr.rel (%p171) target = $region28
      $region27: #{basic_block_forward.1} parent=11 // pred_region
        _
      $region28: #{basic_block_forward.1} parent=11 // pred_fallthru
        _
    $region12: #{basic_block_forward.1} parent=5 // pred_fallthru
      _
    %p174 = scmp.lt.s32.totalorder %s11, 2
    // Predicated region
    $region29: #{basic_block_forward.1} parent=5 // pred_check
      %p175 = pneg %p174
    $region30: #{basic_block_forward.1} parent=5 // pred_check_branch
      %177 = sbr.rel (%p175) target = $region32
    $region31: #{basic_block_forward.1} parent=5 // pred_region
      // Predicated region
      $region33: #{basic_block_forward.1} parent=31 // pred_check
        %p178 = pneg %p31
      $region34: #{basic_block_forward.1} parent=31 // pred_check_branch
        %180 = sbr.rel (%p178) target = $region36
      $region35: #{basic_block_forward.1} parent=31 // pred_region
        %p181 = scmp.lt.s32.totalorder %s11, 1
        %s182 = scalar_select %p181, %s11, 1
        %s183 = smul.addr %s182, 2
        %s184 = smul.addr %s183, 4
        %s185 = scalar_lea.vmem %s0, %s184
      $region36: #{basic_block_forward.1} parent=31 // pred_fallthru
        _
    $region32: #{basic_block_forward.1} parent=5 // pred_fallthru
      _
    %p186 = scmp.le.s32.totalorder 1, %s11
    %p187 = scmp.lt.s32.totalorder %s11, 3
    %p188 = pnand %p186, %p187
    %p189 = pneg %p188
    // Predicated region
    $region37: #{basic_block_forward.1} parent=5 // pred_check
      _
    $region38: #{basic_block_forward.1} parent=5 // pred_check_branch
      %191 = sbr.rel (%p188) target = $region40
    $region39: #{basic_block_forward.1} parent=5 // pred_region
      %s192 = ssub.s32 %s11, 1
      %p193 = scmp.lt.s32.totalorder %s16, 1
      %s194 = scalar_select %p193, %s16, 1
      %s195 = smul.addr %s194, 2
      %s196 = smul.addr %s195, 4
      %s197 = scalar_lea.vmem %s0, %s196
      %p198 = pneg %p37
      %p199 = pneg %p34
      %p200 = pneg %p58
      %p201 = pneg %p55
      %p202 = pneg %p79
      %p203 = pneg %p76
      %p204 = pneg %p100
      %p205 = pneg %p97
      %p206 = pneg %p121
      %p207 = pneg %p118
      %p208 = pneg %p147
      %p209 = pneg %p144
      %p210 = scmp.lt.s32.totalorder %s16, 1
      %s211 = scalar_select %p210, %s16, 1
      %s212 = smul.addr %s211, 2
      %s213 = smul.addr %s212, 4
      %s214 = scalar_lea.vmem %s5, %s213
      %p215 = scmp.lt.s32.totalorder %s16, 1
      %s216 = scalar_select %p215, %s16, 1
      %s217 = smul.addr %s216, 2
      %s218 = smul.addr %s217, 4
      %s219 = scalar_lea.vmem %s0, %s218
      %p220 = scmp.lt.s32.totalorder %s16, 1
      %s221 = scalar_select %p220, %s16, 1
      %s222 = smul.addr %s221, 2
      %s223 = smul.addr %s222, 4
      %s224 = scalar_lea.vmem %s5, %s223
      %vm226 = vcmask 1040384
      %vm227 = vsmask.f32 256
      %vm228 = vmand %vm226, %vm227
      %v229 = vld [vmem:[#allocation2] sm:$0x1]
      %v230 = vsel %vm228, 0, %v229
      %231 = vst [vmem:[#allocation2] sm:$0x1] %v230
      %vm232 = vsmask.f32 7938
      %vm233 = vmand %vm226, %vm232
      %v234 = vld [vmem:[#allocation2 + $0x8] sm:$0x1]
      %v235 = vsel %vm233, 0, %v234
      %236 = vst [vmem:[#allocation2 + $0x8] sm:$0x1] %v235
      %v237 = vld [vmem:[#allocation3] sm:$0x1]
      %v238 = vsel %vm228, 0, %v237
      %239 = vst [vmem:[#allocation3] sm:$0x1] %v238
      %v240 = vld [vmem:[#allocation3 + $0x8] sm:$0x1]
      %v241 = vsel %vm233, 0, %v240
      %242 = vst [vmem:[#allocation3 + $0x8] sm:$0x1] %v241
      %vm243 = vcmask 1043968
      %vm244 = vmand %vm243, %vm232
      %v245 = vld [vmem:[#allocation2] sm:$0xf]
      %v246 = vsel %vm244, 0, %v245
      %247 = vst [vmem:[#allocation2] sm:$0xf] %v246
      %vm248 = vcmask 1043968
      %249 = vst.msk [vmem:[#allocation2 + $0x4] sm:$0xf] %vm248, 0
      %vm250 = vcmask 1040896
      %vm251 = vmand %vm250, %vm227
      %v252 = vld [vmem:[#allocation2 + $0x8] sm:$0x1]
      %v253 = vsel %vm251, 0, %v252
      %254 = vst [vmem:[#allocation2 + $0x8] sm:$0x1] %v253
      %v255 = vld [vmem:[%s1] sm:$0xf]
      %v256 = vld [vmem:[%s1 + $0x4] sm:$0xf]
      %v257 = vld [vmem:[%s1 + $0x8] sm:$0xf]
      %v258 = vld [vmem:[%s1 + $0xc] sm:$0xf]
      %v259 = vld [vmem:[%s1 + $0x10] sm:$0xf]
      %v260 = vld [vmem:[%s1 + $0x14] sm:$0xf]
      %v261 = vld [vmem:[%s1 + $0x18] sm:$0xf]
      %v262 = vld [vmem:[%s1 + $0x1c] sm:$0xf]
      %v263 = vld [vmem:[%s1 + $0x20] sm:$0xf]
      %v264 = vld [vmem:[%s1 + $0x24] sm:$0xf]
      %v265 = vld [vmem:[%s1 + $0x28] sm:$0xf]
      %v266 = vld [vmem:[%s1 + $0x2c] sm:$0xf]
      %v267 = vld [vmem:[%s1 + $0x30] sm:$0xf]
      %v268 = vld [vmem:[%s1 + $0x34] sm:$0xf]
      %v269 = vld [vmem:[%s1 + $0x38] sm:$0xf]
      %v270 = vld [vmem:[%s1 + $0x3c] sm:$0xf]
      %v271 = vld [vmem:[%s1 + $0x40] sm:$0xf]
      %v272 = vld [vmem:[%s1 + $0x44] sm:$0xf]
      %v273 = vld [vmem:[%s1 + $0x48] sm:$0xf]
      %v274 = vld [vmem:[%s1 + $0x4c] sm:$0xf]
      %v275 = vld [vmem:[%s1 + $0x50] sm:$0xf]
      %v276 = vld [vmem:[%s1 + $0x54] sm:$0xf]
      %v277 = vld [vmem:[%s1 + $0x58] sm:$0xf]
      %v278 = vld [vmem:[%s1 + $0x5c] sm:$0xf]
      %v279 = vld [vmem:[%s1 + $0x60] sm:$0xf]
      %v280 = vld [vmem:[%s1 + $0x64] sm:$0xf]
      %v281 = vld [vmem:[%s1 + $0x68] sm:$0xf]
      %v282 = vld [vmem:[%s1 + $0x6c] sm:$0xf]
      %v283 = vld [vmem:[%s1 + $0x70] sm:$0xf]
      %v284 = vld [vmem:[%s1 + $0x74] sm:$0xf]
      %v285 = vld [vmem:[%s1 + $0x78] sm:$0xf]
      %v286 = vld [vmem:[%s1 + $0x7c] sm:$0xf]
      %v287 = vld [vmem:[%s1 + $0x80] sm:$0xf]
      %v288 = vld [vmem:[%s1 + $0x84] sm:$0xf]
      %v289 = vld [vmem:[%s1 + $0x88] sm:$0xf]
      %v290 = vld [vmem:[%s1 + $0x8c] sm:$0xf]
      %v291 = vld [vmem:[%s1 + $0x90] sm:$0xf]
      %v292 = vld [vmem:[%s1 + $0x94] sm:$0xf]
      %v293 = vld [vmem:[%s1 + $0x98] sm:$0xf]
      %v294 = vld [vmem:[%s1 + $0x9c] sm:$0xf]
      %v295 = vld [vmem:[%s1 + $0xa0] sm:$0xf]
      %v296 = vld [vmem:[%s1 + $0xa4] sm:$0xf]
      %v297 = vld [vmem:[%s1 + $0xa8] sm:$0xf]
      %v298 = vld [vmem:[%s1 + $0xac] sm:$0xf]
      %v299 = vld [vmem:[%s1 + $0xb0] sm:$0xf]
      %v300 = vld [vmem:[%s1 + $0xb4] sm:$0xf]
      %v301 = vld [vmem:[%s1 + $0xb8] sm:$0xf]
      %v302 = vld [vmem:[%s1 + $0xbc] sm:$0xf]
      %v303 = vld [vmem:[%s3] sm:$0xf]
      %v304 = vld [vmem:[%s3 + $0x4] sm:$0xf]
      %v305 = vld [vmem:[%s3 + $0x8] sm:$0xf]
      %v306 = vld [vmem:[%s3 + $0xc] sm:$0xf]
      %v307 = vld [vmem:[%s3 + $0x10] sm:$0xf]
      %v308 = vld [vmem:[%s3 + $0x14] sm:$0xf]
      %v309 = vld [vmem:[%s3 + $0x18] sm:$0xf]
      %v310 = vld [vmem:[%s3 + $0x1c] sm:$0xf]
      %v311 = vld [vmem:[%s3 + $0x20] sm:$0xf]
      %v312 = vld [vmem:[%s3 + $0x24] sm:$0xf]
      %v313 = vld [vmem:[%s3 + $0x28] sm:$0xf]
      %v314 = vld [vmem:[%s3 + $0x2c] sm:$0xf]
      %v315 = vld [vmem:[%s3 + $0x30] sm:$0xf]
      %v316 = vld [vmem:[%s3 + $0x34] sm:$0xf]
      %v317 = vld [vmem:[%s3 + $0x38] sm:$0xf]
      %v318 = vld [vmem:[%s3 + $0x3c] sm:$0xf]
      %v319 = vld [vmem:[%s3 + $0x40] sm:$0xf]
      %v320 = vld [vmem:[%s3 + $0x44] sm:$0xf]
      %v321 = vld [vmem:[%s3 + $0x48] sm:$0xf]
      %v322 = vld [vmem:[%s3 + $0x4c] sm:$0xf]
      %v323 = vld [vmem:[%s3 + $0x50] sm:$0xf]
      %v324 = vld [vmem:[%s3 + $0x54] sm:$0xf]
      %v325 = vld [vmem:[%s3 + $0x58] sm:$0xf]
      %v326 = vld [vmem:[%s3 + $0x5c] sm:$0xf]
      %v327 = vld [vmem:[%s3 + $0x60] sm:$0xf]
      %v328 = vld [vmem:[%s3 + $0x64] sm:$0xf]
      %v329 = vld [vmem:[%s3 + $0x68] sm:$0xf]
      %v330 = vld [vmem:[%s3 + $0x6c] sm:$0xf]
      %v331 = vld [vmem:[%s3 + $0x70] sm:$0xf]
      %v332 = vld [vmem:[%s3 + $0x74] sm:$0xf]
      %v333 = vld [vmem:[%s3 + $0x78] sm:$0xf]
      %v334 = vld [vmem:[%s3 + $0x7c] sm:$0xf]
      %v335 = vld [vmem:[%s3 + $0x80] sm:$0xf]
      %v336 = vld [vmem:[%s3 + $0x84] sm:$0xf]
      %v337 = vld [vmem:[%s3 + $0x88] sm:$0xf]
      %v338 = vld [vmem:[%s3 + $0x8c] sm:$0xf]
      %v339 = vld [vmem:[%s3 + $0x90] sm:$0xf]
      %v340 = vld [vmem:[%s3 + $0x94] sm:$0xf]
      %v341 = vld [vmem:[%s3 + $0x98] sm:$0xf]
      %v342 = vld [vmem:[%s3 + $0x9c] sm:$0xf]
      %v343 = vld [vmem:[%s3 + $0xa0] sm:$0xf]
      %v344 = vld [vmem:[%s3 + $0xa4] sm:$0xf]
      %v345 = vld [vmem:[%s3 + $0xa8] sm:$0xf]
      %v346 = vld [vmem:[%s3 + $0xac] sm:$0xf]
      %v347 = vld [vmem:[%s3 + $0xb0] sm:$0xf]
      %v348 = vld [vmem:[%s3 + $0xb4] sm:$0xf]
      %v349 = vld [vmem:[%s3 + $0xb8] sm:$0xf]
      %v350 = vld [vmem:[%s3 + $0xbc] sm:$0xf]
      %v351 = vld [vmem:[%s2] sm:$0x1]
      %v352 = vld [vmem:[%s4] sm:$0x1]
      %v353 = vld [vmem:[%s219] sm:$0xf]
      %v354 = vld [vmem:[%s219 + $0x4] sm:$0xf]
      %vm355 = vsmask.f32 4368
      %vm356 = vmor %vm227, %vm355
      %v358 = vshrl.u32 %v353, 16
      %v360 = vrot.slane %v358, 7
      %v361 = vshll.u32 %v353, 16
      %v363 = vor.u32 %v360, %v361
      %v364 = vrot.slane %v360, 4
      %v366 = vshrl.u32 %v354, 16
      %v368 = vrot.slane %v366, 7
      %v369 = vshll.u32 %v354, 16
      %v371 = vor.u32 %v368, %v369
      %v372 = vsel %vm356, %v364, %v371
      %v373 = vrot.slane %v368, 4
      %vm377 = vcmask 519168
      %vm378 = vmand %vm377, %vm232
      %v379 = vld [vmem:[#allocation2] sm:$0xf]
      %v380 = vsel %vm378, %v363, %v379
      %381 = vst [vmem:[#allocation2] sm:$0xf] %v380
      %vm382 = vcmask 519168
      %383 = vst.msk [vmem:[#allocation2 + $0x4] sm:$0xf] %vm382, %v372
      %vm384 = vcmask 516096
      %vm385 = vmand %vm384, %vm227
      %v386 = vld [vmem:[#allocation2 + $0x8] sm:$0x1]
      %v387 = vsel %vm385, %v373, %v386
      %388 = vst [vmem:[#allocation2 + $0x8] sm:$0x1] %v387
      %v389 = vld [vmem:[#allocation2] sm:$0xf]
      %v390 = vld [vmem:[#allocation2 + $0x4] sm:$0xf]
      %v391 = vld [vmem:[#allocation2 + $0x8] sm:$0x1]
      %v392 = vld [vmem:[#allocation2] sm:$0xe]
      %v395 = vunpack.c.l.b16 %v389
      %v396 = vunpack.c.l.b16 %v390
      %v397 = vpack.c.b16 %v396, %v395
      %v400 = vunpack.c.l.b16 %v391
      %v401 = vpack.c.b16 %v400, %v400
      %vm402 = vsmask.f32 7424
      %v404 = vshrl.u32 %v397, 16
      %v406 = vshll.u32 %v397, 16
      %v408 = vrot.slane %v406, 1
      %v409 = vor.u32 %v404, %v408
      %v411 = vshll.u32 %v401, 16
      %v413 = vrot.slane %v411, 1
      %v414 = vsel %vm402, %v409, %v413
      %v417 = vunpack.c.l.b16 %v392
      %v418 = vpack.c.b16 %v396, %v417
      %vm419 = vcmask 1046528
      %v420 = vrot.slane %v418, 1
      %v421 = vrot.slane %v401, 1
      %v422 = vsel %vm419, %v420, %v421
      %v425 = vlaneseq
      %v426 = vshrl.u32 %v425, 7
      %v427 = vsub.s32 0, %v426
      %v428 = vrot.slane %v351, %v427
      %v478 = vunpack.c.l.b16 %v255
      %v479 = vunpack.c.l.b16 %v256
      %v480 = vunpack.c.l.b16 %v257
      %v481 = vunpack.c.l.b16 %v258
      %v482 = vunpack.c.l.b16 %v259
      %v483 = vunpack.c.l.b16 %v260
      %v484 = vunpack.c.l.b16 %v261
      %v485 = vunpack.c.l.b16 %v262
      %v486 = vunpack.c.l.b16 %v263
      %v487 = vunpack.c.l.b16 %v264
      %v488 = vunpack.c.l.b16 %v265
      %v489 = vunpack.c.l.b16 %v266
      %v490 = vunpack.c.l.b16 %v267
      %v491 = vunpack.c.l.b16 %v268
      %v492 = vunpack.c.l.b16 %v269
      %v493 = vunpack.c.l.b16 %v270
      %v494 = vunpack.c.l.b16 %v271
      %v495 = vunpack.c.l.b16 %v272
      %v496 = vunpack.c.l.b16 %v273
      %v497 = vunpack.c.l.b16 %v274
      %v498 = vunpack.c.l.b16 %v275
      %v499 = vunpack.c.l.b16 %v276
      %v500 = vunpack.c.l.b16 %v277
      %v501 = vunpack.c.l.b16 %v278
      %v502 = vunpack.c.l.b16 %v279
      %v503 = vunpack.c.l.b16 %v280
      %v504 = vunpack.c.l.b16 %v281
      %v505 = vunpack.c.l.b16 %v282
      %v506 = vunpack.c.l.b16 %v283
      %v507 = vunpack.c.l.b16 %v284
      %v508 = vunpack.c.l.b16 %v285
      %v509 = vunpack.c.l.b16 %v286
      %v510 = vunpack.c.l.b16 %v287
      %v511 = vunpack.c.l.b16 %v288
      %v512 = vunpack.c.l.b16 %v289
      %v513 = vunpack.c.l.b16 %v290
      %v514 = vunpack.c.l.b16 %v291
      %v515 = vunpack.c.l.b16 %v292
      %v516 = vunpack.c.l.b16 %v293
      %v517 = vunpack.c.l.b16 %v294
      %v518 = vunpack.c.l.b16 %v295
      %v519 = vunpack.c.l.b16 %v296
      %v520 = vunpack.c.l.b16 %v297
      %v521 = vunpack.c.l.b16 %v298
      %v522 = vunpack.c.l.b16 %v299
      %v523 = vunpack.c.l.b16 %v300
      %v524 = vunpack.c.l.b16 %v301
      %v525 = vunpack.c.l.b16 %v302
      %v526 = vpack.c.b16 %v479, %v478
      %v527 = vpack.c.b16 %v481, %v480
      %v528 = vpack.c.b16 %v483, %v482
      %v529 = vpack.c.b16 %v485, %v484
      %v530 = vpack.c.b16 %v487, %v486
      %v531 = vpack.c.b16 %v489, %v488
      %v532 = vpack.c.b16 %v491, %v490
      %v533 = vpack.c.b16 %v493, %v492
      %v534 = vpack.c.b16 %v495, %v494
      %v535 = vpack.c.b16 %v497, %v496
      %v536 = vpack.c.b16 %v499, %v498
      %v537 = vpack.c.b16 %v501, %v500
      %v538 = vpack.c.b16 %v503, %v502
      %v539 = vpack.c.b16 %v505, %v504
      %v540 = vpack.c.b16 %v507, %v506
      %v541 = vpack.c.b16 %v509, %v508
      %v542 = vpack.c.b16 %v511, %v510
      %v543 = vpack.c.b16 %v513, %v512
      %v544 = vpack.c.b16 %v515, %v514
      %v545 = vpack.c.b16 %v517, %v516
      %v546 = vpack.c.b16 %v519, %v518
      %v547 = vpack.c.b16 %v521, %v520
      %v548 = vpack.c.b16 %v523, %v522
      %v549 = vpack.c.b16 %v525, %v524
      %574 = vmatprep.subr.bf16.mxu0 0
      %575 = vmatpush1.bf16.msra.mxu0 %v526
      %576 = vmatprep.subr.bf16.mxu0 0
      %577 = vmatpush1.bf16.msra.mxu0 %v527
      %578 = vmatprep.subr.bf16.mxu0 0
      %579 = vmatpush1.bf16.msra.mxu0 %v528
      %580 = vmatprep.subr.bf16.mxu0 0
      %581 = vmatpush1.bf16.msra.mxu0 %v529
      %582 = vmatprep.subr.bf16.mxu0 0
      %583 = vmatpush1.bf16.msra.mxu0 %v530
      %584 = vmatprep.subr.bf16.mxu0 0
      %585 = vmatpush1.bf16.msra.mxu0 %v531
      %586 = vmatprep.subr.bf16.mxu0 0
      %587 = vmatpush1.bf16.msra.mxu0 %v532
      %588 = vmatprep.subr.bf16.mxu0 0
      %589 = vmatpush1.bf16.msra.mxu0 %v533
      %590 = vmatprep.subr.bf16.mxu0 0
      %591 = vmatpush1.bf16.msra.mxu0 %v534
      %592 = vmatprep.subr.bf16.mxu0 0
      %593 = vmatpush1.bf16.msra.mxu0 %v535
      %594 = vmatprep.subr.bf16.mxu0 0
      %595 = vmatpush1.bf16.msra.mxu0 %v536
      %596 = vmatprep.subr.bf16.mxu0 0
      %597 = vmatpush1.bf16.msra.mxu0 %v537
      %598 = vmatprep.subr.bf16.mxu0 0
      %599 = vmatpush1.bf16.msra.mxu0 %v538
      %600 = vmatprep.subr.bf16.mxu0 0
      %601 = vmatpush1.bf16.msra.mxu0 %v539
      %602 = vmatprep.subr.bf16.mxu0 0
      %603 = vmatpush1.bf16.msra.mxu0 %v540
      %604 = vmatprep.subr.bf16.mxu0 0
      %605 = vmatpush1.bf16.msra.mxu0 %v541
      %606 = vmatprep.mubr.bf16.mxu0 %v414
      %607 = vmatmul.mubr.bf16.gmra.mrb[0].mxu0 %v397
      %v608 = vpop.f32.mrb[0].mxu0
      %v609 = vadd.f32 %v428, %v608
      %v610 = vpop.f32.mrb[0].mxu0
      %v611 = vpop.f32.mrb[0].mxu0
      %v612 = vadd.f32 %v428, %v611
      %v613 = vpop.f32.mrb[0].mxu0
      %614 = vdwg.mxu0
      %615 = vmatprep.subr.bf16.mxu0 0
      %616 = vmatpush1.bf16.msra.mxu0 %v542
      %617 = vmatprep.subr.bf16.mxu0 0
      %618 = vmatpush1.bf16.msra.mxu0 %v543
      %619 = vmatprep.subr.bf16.mxu0 0
      %620 = vmatpush1.bf16.msra.mxu0 %v544
      %621 = vmatprep.subr.bf16.mxu0 0
      %622 = vmatpush1.bf16.msra.mxu0 %v545
      %623 = vmatprep.subr.bf16.mxu0 0
      %624 = vmatpush1.bf16.msra.mxu0 %v546
      %625 = vmatprep.subr.bf16.mxu0 0
      %626 = vmatpush1.bf16.msra.mxu0 %v547
      %627 = vmatprep.subr.bf16.mxu0 0
      %628 = vmatpush1.bf16.msra.mxu0 %v548
      %629 = vmatprep.subr.bf16.mxu0 0
      %630 = vmatpush1.bf16.msra.mxu0 %v549
      %631 = vmatprep.subr.bf16.mxu0 0
      %632 = vmatpush1.bf16.msra.mxu0 0
      %633 = vmatprep.subr.bf16.mxu0 0
      %634 = vmatpush1.bf16.msra.mxu0 0
      %635 = vmatprep.subr.bf16.mxu0 0
      %636 = vmatpush1.bf16.msra.mxu0 0
      %637 = vmatprep.subr.bf16.mxu0 0
      %638 = vmatpush1.bf16.msra.mxu0 0
      %639 = vmatprep.subr.bf16.mxu0 0
      %640 = vmatpush1.bf16.msra.mxu0 0
      %641 = vmatprep.subr.bf16.mxu0 0
      %642 = vmatpush1.bf16.msra.mxu0 0
      %643 = vmatprep.subr.bf16.mxu0 0
      %644 = vmatpush1.bf16.msra.mxu0 0
      %645 = vmatprep.subr.bf16.mxu0 0
      %646 = vmatpush1.bf16.msra.mxu0 0
      %647 = vmatprep.mubr.bf16.mxu0 0
      %648 = vmatmul.mubr.bf16.gmra.mrb[0].mxu0 %v422
      %v649 = vpop.f32.mrb[0].mxu0
      %v650 = vadd.f32 %v609, %v649
      %v651 = vpop.f32.mrb[0].mxu0
      %v652 = vpop.f32.mrb[0].mxu0
      %v653 = vadd.f32 %v612, %v652
      %v654 = vpop.f32.mrb[0].mxu0
      %655 = vdwg.mxu0
      %v656 = vmax.f32 %v650, 0.0
      %v657 = vmax.f32 %v653, 0.0
      %v658 = vpack.c.bf16 %v657, %v656
      %v660 = vunpack.c.l.b16 %v658
      %v661 = vunpack.c.h.b16 %v658
      %v662 = vpack.c.b16 %v660, %v660
      %v663 = vpack.c.b16 %v661, %v661
      %v665 = vshrl.u32 %v662, 16
      %v667 = vrot.slane %v665, 7
      %v668 = vshll.u32 %v662, 16
      %v670 = vor.u32 %v667, %v668
      %v671 = vrot.slane %v667, 4
      %v673 = vshrl.u32 %v663, 16
      %v675 = vrot.slane %v673, 7
      %v676 = vshll.u32 %v663, 16
      %v678 = vor.u32 %v675, %v676
      %v679 = vsel %vm356, %v671, %v678
      %v680 = vrot.slane %v675, 4
      %vm684 = vcmask 1043456
      %vm685 = vmand %vm684, %vm232
      %v686 = vld [vmem:[#allocation3] sm:$0xf]
      %v687 = vsel %vm685, %v670, %v686
      %688 = vst [vmem:[#allocation3] sm:$0xf] %v687
      %689 = vst [vmem:[#allocation3 + $0x4] sm:$0xf] %v679
      %v690 = vld [vmem:[#allocation3 + $0x8] sm:$0x1]
      %v691 = vsel %vm228, %v680, %v690
      %692 = vst [vmem:[#allocation3 + $0x8] sm:$0x1] %v691
      %v693 = vld [vmem:[#allocation3] sm:$0xf]
      %v694 = vld [vmem:[#allocation3 + $0x4] sm:$0xf]
      %v695 = vld [vmem:[#allocation3 + $0x8] sm:$0x1]
      %v696 = vld [vmem:[#allocation3] sm:$0xe]
      %v699 = vunpack.c.l.b16 %v693
      %v700 = vunpack.c.l.b16 %v694
      %v701 = vpack.c.b16 %v700, %v699
      %v704 = vunpack.c.l.b16 %v695
      %v705 = vpack.c.b16 %v704, %v704
      %v707 = vshrl.u32 %v701, 16
      %v709 = vshll.u32 %v701, 16
      %v711 = vrot.slane %v709, 1
      %v712 = vor.u32 %v707, %v711
      %v714 = vshll.u32 %v705, 16
      %v716 = vrot.slane %v714, 1
      %v717 = vsel %vm402, %v712, %v716
      %v720 = vunpack.c.l.b16 %v696
      %v721 = vpack.c.b16 %v700, %v720
      %v722 = vrot.slane %v721, 1
      %v723 = vrot.slane %v705, 1
      %v724 = vsel %vm419, %v722, %v723
      %v727 = vlaneseq
      %v728 = vshrl.u32 %v727, 7
      %v729 = vsub.s32 0, %v728
      %v730 = vrot.slane %v352, %v729
      %v780 = vunpack.c.l.b16 %v303
      %v781 = vunpack.c.l.b16 %v304
      %v782 = vunpack.c.l.b16 %v305
      %v783 = vunpack.c.l.b16 %v306
      %v784 = vunpack.c.l.b16 %v307
      %v785 = vunpack.c.l.b16 %v308
      %v786 = vunpack.c.l.b16 %v309
      %v787 = vunpack.c.l.b16 %v310
      %v788 = vunpack.c.l.b16 %v311
      %v789 = vunpack.c.l.b16 %v312
      %v790 = vunpack.c.l.b16 %v313
      %v791 = vunpack.c.l.b16 %v314
      %v792 = vunpack.c.l.b16 %v315
      %v793 = vunpack.c.l.b16 %v316
      %v794 = vunpack.c.l.b16 %v317
      %v795 = vunpack.c.l.b16 %v318
      %v796 = vunpack.c.l.b16 %v319
      %v797 = vunpack.c.l.b16 %v320
      %v798 = vunpack.c.l.b16 %v321
      %v799 = vunpack.c.l.b16 %v322
      %v800 = vunpack.c.l.b16 %v323
      %v801 = vunpack.c.l.b16 %v324
      %v802 = vunpack.c.l.b16 %v325
      %v803 = vunpack.c.l.b16 %v326
      %v804 = vunpack.c.l.b16 %v327
      %v805 = vunpack.c.l.b16 %v328
      %v806 = vunpack.c.l.b16 %v329
      %v807 = vunpack.c.l.b16 %v330
      %v808 = vunpack.c.l.b16 %v331
      %v809 = vunpack.c.l.b16 %v332
      %v810 = vunpack.c.l.b16 %v333
      %v811 = vunpack.c.l.b16 %v334
      %v812 = vunpack.c.l.b16 %v335
      %v813 = vunpack.c.l.b16 %v336
      %v814 = vunpack.c.l.b16 %v337
      %v815 = vunpack.c.l.b16 %v338
      %v816 = vunpack.c.l.b16 %v339
      %v817 = vunpack.c.l.b16 %v340
      %v818 = vunpack.c.l.b16 %v341
      %v819 = vunpack.c.l.b16 %v342
      %v820 = vunpack.c.l.b16 %v343
      %v821 = vunpack.c.l.b16 %v344
      %v822 = vunpack.c.l.b16 %v345
      %v823 = vunpack.c.l.b16 %v346
      %v824 = vunpack.c.l.b16 %v347
      %v825 = vunpack.c.l.b16 %v348
      %v826 = vunpack.c.l.b16 %v349
      %v827 = vunpack.c.l.b16 %v350
      %v828 = vpack.c.b16 %v781, %v780
      %v829 = vpack.c.b16 %v783, %v782
      %v830 = vpack.c.b16 %v785, %v784
      %v831 = vpack.c.b16 %v787, %v786
      %v832 = vpack.c.b16 %v789, %v788
      %v833 = vpack.c.b16 %v791, %v790
      %v834 = vpack.c.b16 %v793, %v792
      %v835 = vpack.c.b16 %v795, %v794
      %v836 = vpack.c.b16 %v797, %v796
      %v837 = vpack.c.b16 %v799, %v798
      %v838 = vpack.c.b16 %v801, %v800
      %v839 = vpack.c.b16 %v803, %v802
      %v840 = vpack.c.b16 %v805, %v804
      %v841 = vpack.c.b16 %v807, %v806
      %v842 = vpack.c.b16 %v809, %v808
      %v843 = vpack.c.b16 %v811, %v810
      %v844 = vpack.c.b16 %v813, %v812
      %v845 = vpack.c.b16 %v815, %v814
      %v846 = vpack.c.b16 %v817, %v816
      %v847 = vpack.c.b16 %v819, %v818
      %v848 = vpack.c.b16 %v821, %v820
      %v849 = vpack.c.b16 %v823, %v822
      %v850 = vpack.c.b16 %v825, %v824
      %v851 = vpack.c.b16 %v827, %v826
      %876 = vmatprep.subr.bf16.mxu0 0
      %877 = vmatpush1.bf16.msra.mxu0 %v828
      %878 = vmatprep.subr.bf16.mxu0 0
      %879 = vmatpush1.bf16.msra.mxu0 %v829
      %880 = vmatprep.subr.bf16.mxu0 0
      %881 = vmatpush1.bf16.msra.mxu0 %v830
      %882 = vmatprep.subr.bf16.mxu0 0
      %883 = vmatpush1.bf16.msra.mxu0 %v831
      %884 = vmatprep.subr.bf16.mxu0 0
      %885 = vmatpush1.bf16.msra.mxu0 %v832
      %886 = vmatprep.subr.bf16.mxu0 0
      %887 = vmatpush1.bf16.msra.mxu0 %v833
      %888 = vmatprep.subr.bf16.mxu0 0
      %889 = vmatpush1.bf16.msra.mxu0 %v834
      %890 = vmatprep.subr.bf16.mxu0 0
      %891 = vmatpush1.bf16.msra.mxu0 %v835
      %892 = vmatprep.subr.bf16.mxu0 0
      %893 = vmatpush1.bf16.msra.mxu0 %v836
      %894 = vmatprep.subr.bf16.mxu0 0
      %895 = vmatpush1.bf16.msra.mxu0 %v837
      %896 = vmatprep.subr.bf16.mxu0 0
      %897 = vmatpush1.bf16.msra.mxu0 %v838
      %898 = vmatprep.subr.bf16.mxu0 0
      %899 = vmatpush1.bf16.msra.mxu0 %v839
      %900 = vmatprep.subr.bf16.mxu0 0
      %901 = vmatpush1.bf16.msra.mxu0 %v840
      %902 = vmatprep.subr.bf16.mxu0 0
      %903 = vmatpush1.bf16.msra.mxu0 %v841
      %904 = vmatprep.subr.bf16.mxu0 0
      %905 = vmatpush1.bf16.msra.mxu0 %v842
      %906 = vmatprep.subr.bf16.mxu0 0
      %907 = vmatpush1.bf16.msra.mxu0 %v843
      %908 = vmatprep.mubr.bf16.mxu0 %v717
      %909 = vmatmul.mubr.bf16.gmra.mrb[0].mxu0 %v701
      %v910 = vpop.f32.mrb[0].mxu0
      %v911 = vadd.f32 %v730, %v910
      %v912 = vpop.f32.mrb[0].mxu0
      %v913 = vpop.f32.mrb[0].mxu0
      %v914 = vadd.f32 %v730, %v913
      %v915 = vpop.f32.mrb[0].mxu0
      %916 = vdwg.mxu0
      %917 = vmatprep.subr.bf16.mxu0 0
      %918 = vmatpush1.bf16.msra.mxu0 %v844
      %919 = vmatprep.subr.bf16.mxu0 0
      %920 = vmatpush1.bf16.msra.mxu0 %v845
      %921 = vmatprep.subr.bf16.mxu0 0
      %922 = vmatpush1.bf16.msra.mxu0 %v846
      %923 = vmatprep.subr.bf16.mxu0 0
      %924 = vmatpush1.bf16.msra.mxu0 %v847
      %925 = vmatprep.subr.bf16.mxu0 0
      %926 = vmatpush1.bf16.msra.mxu0 %v848
      %927 = vmatprep.subr.bf16.mxu0 0
      %928 = vmatpush1.bf16.msra.mxu0 %v849
      %929 = vmatprep.subr.bf16.mxu0 0
      %930 = vmatpush1.bf16.msra.mxu0 %v850
      %931 = vmatprep.subr.bf16.mxu0 0
      %932 = vmatpush1.bf16.msra.mxu0 %v851
      %933 = vmatprep.subr.bf16.mxu0 0
      %934 = vmatpush1.bf16.msra.mxu0 0
      %935 = vmatprep.subr.bf16.mxu0 0
      %936 = vmatpush1.bf16.msra.mxu0 0
      %937 = vmatprep.subr.bf16.mxu0 0
      %938 = vmatpush1.bf16.msra.mxu0 0
      %939 = vmatprep.subr.bf16.mxu0 0
      %940 = vmatpush1.bf16.msra.mxu0 0
      %941 = vmatprep.subr.bf16.mxu0 0
      %942 = vmatpush1.bf16.msra.mxu0 0
      %943 = vmatprep.subr.bf16.mxu0 0
      %944 = vmatpush1.bf16.msra.mxu0 0
      %945 = vmatprep.subr.bf16.mxu0 0
      %946 = vmatpush1.bf16.msra.mxu0 0
      %947 = vmatprep.subr.bf16.mxu0 0
      %948 = vmatpush1.bf16.msra.mxu0 0
      %949 = vmatprep.mubr.bf16.mxu0 0
      %950 = vmatmul.mubr.bf16.gmra.mrb[0].mxu0 %v724
      %v951 = vpop.f32.mrb[0].mxu0
      %v952 = vadd.f32 %v911, %v951
      %v953 = vpop.f32.mrb[0].mxu0
      %v954 = vpop.f32.mrb[0].mxu0
      %v955 = vadd.f32 %v914, %v954
      %v956 = vpop.f32.mrb[0].mxu0
      %957 = vdwg.mxu0
      %v958 = vmax.f32 %v952, 0.0
      %v959 = vmax.f32 %v955, 0.0
      %v960 = vpack.c.bf16 %v959, %v958
      %v962 = vunpack.c.l.b16 %v960
      %v963 = vunpack.c.h.b16 %v960
      %v964 = vpack.c.b16 %v962, %v962
      %v965 = vpack.c.b16 %v963, %v963
      %968 = vst [vmem:[%s224] sm:$0xf] %v964
      %969 = vst [vmem:[%s224 + $0x4] sm:$0xf] %v965
      %p970 = scmp.lt.s32.totalorder %s16, 1
      %s971 = scalar_select %p970, %s16, 1
      %s972 = smul.addr %s971, 2
      %s973 = smul.addr %s972, 4
      %s974 = scalar_lea.vmem %s5, %s973
      // Predicated region
      $region41: #{basic_block_forward.1} parent=39 // pred_check
        %p975 = pneg %p144
      $region42: #{basic_block_forward.1} parent=39 // pred_check_branch
        %977 = sbr.rel (%p975) target = $region44
      $region43: #{basic_block_forward.1} parent=39 // pred_region
        _
      $region44: #{basic_block_forward.1} parent=39 // pred_fallthru
        _
    $region40: #{basic_block_forward.1} parent=5 // pred_fallthru
      _
    %p978 = scmp.le.s32.totalorder 2, %s11
    // Predicated region
    $region45: #{basic_block_forward.1} parent=5 // pred_check
      %p979 = pneg %p978
    $region46: #{basic_block_forward.1} parent=5 // pred_check_branch
      %981 = sbr.rel (%p979) target = $region48
    $region47: #{basic_block_forward.1} parent=5 // pred_region
      %s982 = ssub.s32 %s11, 2
      // Predicated region
      $region49: #{basic_block_forward.1} parent=47 // pred_check
        %p983 = pneg %p150
      $region50: #{basic_block_forward.1} parent=47 // pred_check_branch
        %985 = sbr.rel (%p983) target = $region52
      $region51: #{basic_block_forward.1} parent=47 // pred_region
        %p986 = scmp.lt.s32.totalorder %s17, 1
        %s987 = scalar_select %p986, %s17, 1
        %s988 = smul.addr %s987, 2
        %s989 = smul.addr %s988, 4
        %s990 = scalar_lea.vmem %s5, %s989
      $region52: #{basic_block_forward.1} parent=47 // pred_fallthru
        _
    $region48: #{basic_block_forward.1} parent=5 // pred_fallthru
      _
  $region6: #{basic_block_forward.1} parent=0 // loop_footer
    %s15 = sadd.s32 1, %s11
  $region7: #{basic_block_forward.1} parent=0 // loop_footer_branch
    %10 = sbr.rel target = $region3
  $region8: #{basic_block_forward.1} parent=0 // loop_exit
    _

</llo_original>
